<compile_context>
chip_gen: v5e
topology: v5e:2x2
jax: 0.10.0
libtpu: 0.0.40
codegen_flags: <defaults>
</compile_context>

<pallas_src>
import functools

import jax
import jax.numpy as jnp
from jax import lax
from jax.experimental import pallas as pl
from jax.experimental.pallas import tpu as pltpu


def mha_fused_kernel(q_ref, k_ref, v_ref, wq_ref, wk_ref, wv_ref, wo_ref, bo_ref,
                     o_ref, *, batch, seq_q, seq_kv, num_heads,
                     query_dim, key_dim, value_dim):
    # Fused projections: one wide bf16 matmul per input tensor (all heads at
    # once), f32 accumulation on the MXU.  Scale is already folded into Wq.
    qp = jnp.dot(q_ref[...], wq_ref[...],
                 preferred_element_type=jnp.float32).astype(jnp.bfloat16)  # (B*Sq, H*Dq)
    kp = jnp.dot(k_ref[...], wk_ref[...],
                 preferred_element_type=jnp.float32).astype(jnp.bfloat16)  # (B*Skv, H*Dk)
    vp = jnp.dot(v_ref[...], wv_ref[...],
                 preferred_element_type=jnp.float32).astype(jnp.bfloat16)  # (B*Skv, H*Dv)

    wo = wo_ref[...]      # (H*Dv, Din), bf16
    bias = bo_ref[...]    # (1, Din), f32
    din = bias.shape[-1]

    # Static (fully unrolled) loops: B*H = 8 tiny head problems at these shapes.
    for b in range(batch):
        acc = jnp.zeros((seq_q, din), jnp.float32)
        for h in range(num_heads):
            qh = qp[b * seq_q:(b + 1) * seq_q, h * query_dim:(h + 1) * query_dim]
            kh = kp[b * seq_kv:(b + 1) * seq_kv, h * key_dim:(h + 1) * key_dim]
            vh = vp[b * seq_kv:(b + 1) * seq_kv, h * value_dim:(h + 1) * value_dim]

            # Q @ K^T without materializing a transpose: contract last dims.
            s = lax.dot_general(qh, kh, (((1,), (1,)), ((), ())),
                                preferred_element_type=jnp.float32)   # (Sq, Skv)
            s = s - jnp.max(s, axis=-1, keepdims=True)
            p = jnp.exp(s)
            p = p * pl.reciprocal(jnp.sum(p, axis=-1, keepdims=True), approx=True)

            oh = jnp.dot(p.astype(jnp.bfloat16), vh,
                         preferred_element_type=jnp.float32).astype(jnp.bfloat16)  # (Sq, Dv)
            woh = wo[h * value_dim:(h + 1) * value_dim, :]                          # (Dv, Din)
            acc = acc + jnp.dot(oh, woh, preferred_element_type=jnp.float32)        # (Sq, Din)

        # Bias added once per batch block; single sublane-aligned store.
        o_ref[b * seq_q:(b + 1) * seq_q, :] = (acc + bias).astype(o_ref.dtype)


def multi_head_attention(query, key, value, wq, wk, wv, w_out, b_out):
    B, Sq, Din = query.shape
    Skv = key.shape[1]
    H, _, Dq = wq.shape
    Dk = wk.shape[-1]
    Dv = wv.shape[-1]
    inv_scale = 1.0 / (float(Dk) ** 0.5)

    # Host-side (tiny, once): pack per-head weights along the output dim, fold
    # the softmax scale into Wq, and cast all MXU operands to bf16.
    wq_cat = (jnp.transpose(wq, (1, 0, 2)).reshape(Din, H * Dq)
              * inv_scale).astype(jnp.bfloat16)
    wk_cat = jnp.transpose(wk, (1, 0, 2)).reshape(Din, H * Dk).astype(jnp.bfloat16)
    wv_cat = jnp.transpose(wv, (1, 0, 2)).reshape(Din, H * Dv).astype(jnp.bfloat16)
    wo_bf = w_out.astype(jnp.bfloat16)
    b_out2d = b_out.reshape(1, Din)                       # keep bias add in f32

    # Flatten batch+seq on the host so the kernel sees plain 2-D tiles.
    q2 = query.reshape(B * Sq, Din).astype(jnp.bfloat16)
    k2 = key.reshape(B * Skv, Din).astype(jnp.bfloat16)
    v2 = value.reshape(B * Skv, Din).astype(jnp.bfloat16)

    kernel = functools.partial(
        mha_fused_kernel,
        batch=B, seq_q=Sq, seq_kv=Skv, num_heads=H,
        query_dim=Dq, key_dim=Dk, value_dim=Dv)

    # Advisory cost estimate so XLA schedules/overlaps this tiny kernel well.
    flops = (2 * (B * Sq) * Din * (H * Dq)
             + 2 * (B * Skv) * Din * (H * Dk)
             + 2 * (B * Skv) * Din * (H * Dv)
             + B * H * (2 * Sq * Skv * Dk + 2 * Sq * Skv * Dv + 2 * Sq * Dv * Din))
    transcendentals = B * H * Sq * Skv
    bytes_accessed = (2 * (B * Sq * Din + 2 * B * Skv * Din
                           + Din * H * (Dq + Dk + Dv) + H * Dv * Din)
                      + 4 * (Din + B * Sq * Din))
    ce = pl.CostEstimate(flops=flops, transcendentals=transcendentals,
                         bytes_accessed=bytes_accessed)

    out_flat = pl.pallas_call(
        kernel,
        grid=(1,),   # single grid step: whole (tiny) problem, no per-step overhead
        in_specs=[
            pl.BlockSpec((B * Sq, Din), lambda i: (0, 0)),     # query  (bf16)
            pl.BlockSpec((B * Skv, Din), lambda i: (0, 0)),    # key    (bf16)
            pl.BlockSpec((B * Skv, Din), lambda i: (0, 0)),    # value  (bf16)
            pl.BlockSpec((Din, H * Dq), lambda i: (0, 0)),     # Wq (scaled, packed)
            pl.BlockSpec((Din, H * Dk), lambda i: (0, 0)),     # Wk (packed)
            pl.BlockSpec((Din, H * Dv), lambda i: (0, 0)),     # Wv (packed)
            pl.BlockSpec((H * Dv, Din), lambda i: (0, 0)),     # W_out
            pl.BlockSpec((1, Din), lambda i: (0, 0)),          # b_out (f32)
        ],
        out_specs=pl.BlockSpec((B * Sq, Din), lambda i: (0, 0)),
        out_shape=jax.ShapeDtypeStruct((B * Sq, Din), jnp.float32),
        compiler_params=pltpu.CompilerParams(
            dimension_semantics=("arbitrary",)),
        cost_estimate=ce,
    )(q2, k2, v2, wq_cat, wk_cat, wv_cat, wo_bf, b_out2d)

    return out_flat.reshape(B, Sq, Din)


def reference_mha(query, key, value, wq, wk, wv, w_out, b_out):
    """Pure-JAX (f32) mirror of the PyTorch forward for validation."""
    H = wq.shape[0]
    Dk = wk.shape[-1]
    outs = []
    for h in range(H):
        q = query @ wq[h]
        k = key @ wk[h]
        v = value @ wv[h]
        s = jnp.einsum("bqd,bkd->bqk", q, k) / (Dk ** 0.5)
        p = jax.nn.softmax(s, axis=-1)
        outs.append(jnp.einsum("bqk,bkd->bqd", p, v))
    cat = jnp.concatenate(outs, axis=-1)
    return cat @ w_out + b_out


if __name__ == "__main__":
    # Module hyper-parameters (small, consistent with the forward pass).
    num_heads = 4
    input_dim = 16
    query_dim = 8
    key_dim = 8
    value_dim = 8
    B, Sq, Skv = 2, 8, 8

    key0 = jax.random.PRNGKey(0)
    ks = jax.random.split(key0, 8)

    # Deterministic synthetic parameters (torch.nn.Linear shapes, transposed
    # so the kernel does x @ W).
    wq = jax.random.normal(ks[0], (num_heads, input_dim, query_dim), jnp.float32) * 0.1
    wk = jax.random.normal(ks[1], (num_heads, input_dim, key_dim), jnp.float32) * 0.1
    wv = jax.random.normal(ks[2], (num_heads, input_dim, value_dim), jnp.float32) * 0.1
    w_out = jax.random.normal(ks[3], (num_heads * value_dim, input_dim), jnp.float32) * 0.1
    b_out = jax.random.normal(ks[4], (input_dim,), jnp.float32) * 0.1

    # Inputs: (B, S, input_dim)
    query = jax.random.normal(ks[5], (B, Sq, input_dim), jnp.float32)
    key_in = jax.random.normal(ks[6], (B, Skv, input_dim), jnp.float32)
    value_in = jax.random.normal(ks[7], (B, Skv, input_dim), jnp.float32)

    out = multi_head_attention(query, key_in, value_in, wq, wk, wv, w_out, b_out)
    out = jax.block_until_ready(out)

    ref = reference_mha(query, key_in, value_in, wq, wk, wv, w_out, b_out)
    assert out.shape == (B, Sq, input_dim), out.shape
    # Tolerance accounts for bf16 MXU operands + approximate EUP reciprocal.
    assert jnp.allclose(out, ref, atol=3e-2, rtol=3e-2), "mismatch vs reference"

    print("KERNEL_OK")
</pallas_src>

<mosaic_0001>
module attributes {stable_mosaic.version = 11 : i64} {
  func.func @mha_fused_kernel(%arg0: i32, %arg1: memref<16x16xbf16, #tpu.memory_space<vmem>>, %arg2: memref<16x16xbf16, #tpu.memory_space<vmem>>, %arg3: memref<16x16xbf16, #tpu.memory_space<vmem>>, %arg4: memref<16x32xbf16, #tpu.memory_space<vmem>>, %arg5: memref<16x32xbf16, #tpu.memory_space<vmem>>, %arg6: memref<16x32xbf16, #tpu.memory_space<vmem>>, %arg7: memref<32x16xbf16, #tpu.memory_space<vmem>>, %arg8: memref<1x16xf32, #tpu.memory_space<vmem>>, %arg9: memref<16x16xf32, #tpu.memory_space<vmem>>) attributes {dimension_semantics = [#tpu.dimension_semantics<arbitrary>], iteration_bounds = array<i64: 1>, scalar_prefetch = 0 : i64, scratch_operands = 0 : i64, tpu.core_type = #tpu.core_type<tc>, window_params = [{pipeline_mode = #tpu.pipeline_mode<synchronous>, transform_indices = @transform_0, window_bounds = array<i64: 16, 16>}, {pipeline_mode = #tpu.pipeline_mode<synchronous>, transform_indices = @transform_1, window_bounds = array<i64: 16, 16>}, {pipeline_mode = #tpu.pipeline_mode<synchronous>, transform_indices = @transform_2, window_bounds = array<i64: 16, 16>}, {pipeline_mode = #tpu.pipeline_mode<synchronous>, transform_indices = @transform_3, window_bounds = array<i64: 16, 32>}, {pipeline_mode = #tpu.pipeline_mode<synchronous>, transform_indices = @transform_4, window_bounds = array<i64: 16, 32>}, {pipeline_mode = #tpu.pipeline_mode<synchronous>, transform_indices = @transform_5, window_bounds = array<i64: 16, 32>}, {pipeline_mode = #tpu.pipeline_mode<synchronous>, transform_indices = @transform_6, window_bounds = array<i64: 32, 16>}, {pipeline_mode = #tpu.pipeline_mode<synchronous>, transform_indices = @transform_7, window_bounds = array<i64: 1, 16>}, {pipeline_mode = #tpu.pipeline_mode<synchronous>, transform_indices = @transform_8, window_bounds = array<i64: 16, 16>}]} {
    %c0 = arith.constant 0 : index
    %c0_0 = arith.constant 0 : index
    %0 = vector.load %arg1[%c0, %c0_0] : memref<16x16xbf16, #tpu.memory_space<vmem>>, vector<16x16xbf16>
    %c0_1 = arith.constant 0 : index
    %c0_2 = arith.constant 0 : index
    %1 = vector.load %arg4[%c0_1, %c0_2] : memref<16x32xbf16, #tpu.memory_space<vmem>>, vector<16x32xbf16>
    %cst = arith.constant dense<0.000000e+00> : vector<16x32xf32>
    %2 = tpu.matmul %0, %1, %cst {dimension_numbers = #tpu.dot_dimension_numbers<[1], [0], [0], [1], [0, 0, 1, 1], [], []>} : vector<16x16xbf16>, vector<16x32xbf16>, vector<16x32xf32> -> vector<16x32xf32>
    %3 = arith.truncf %2 : vector<16x32xf32> to vector<16x32xbf16>
    %c0_3 = arith.constant 0 : index
    %c0_4 = arith.constant 0 : index
    %4 = vector.load %arg2[%c0_3, %c0_4] : memref<16x16xbf16, #tpu.memory_space<vmem>>, vector<16x16xbf16>
    %c0_5 = arith.constant 0 : index
    %c0_6 = arith.constant 0 : index
    %5 = vector.load %arg5[%c0_5, %c0_6] : memref<16x32xbf16, #tpu.memory_space<vmem>>, vector<16x32xbf16>
    %cst_7 = arith.constant dense<0.000000e+00> : vector<16x32xf32>
    %6 = tpu.matmul %4, %5, %cst_7 {dimension_numbers = #tpu.dot_dimension_numbers<[1], [0], [0], [1], [0, 0, 1, 1], [], []>} : vector<16x16xbf16>, vector<16x32xbf16>, vector<16x32xf32> -> vector<16x32xf32>
    %7 = arith.truncf %6 : vector<16x32xf32> to vector<16x32xbf16>
    %c0_8 = arith.constant 0 : index
    %c0_9 = arith.constant 0 : index
    %8 = vector.load %arg3[%c0_8, %c0_9] : memref<16x16xbf16, #tpu.memory_space<vmem>>, vector<16x16xbf16>
    %c0_10 = arith.constant 0 : index
    %c0_11 = arith.constant 0 : index
    %9 = vector.load %arg6[%c0_10, %c0_11] : memref<16x32xbf16, #tpu.memory_space<vmem>>, vector<16x32xbf16>
    %cst_12 = arith.constant dense<0.000000e+00> : vector<16x32xf32>
    %10 = tpu.matmul %8, %9, %cst_12 {dimension_numbers = #tpu.dot_dimension_numbers<[1], [0], [0], [1], [0, 0, 1, 1], [], []>} : vector<16x16xbf16>, vector<16x32xbf16>, vector<16x32xf32> -> vector<16x32xf32>
    %11 = arith.truncf %10 : vector<16x32xf32> to vector<16x32xbf16>
    %c0_13 = arith.constant 0 : index
    %c0_14 = arith.constant 0 : index
    %12 = vector.load %arg7[%c0_13, %c0_14] : memref<32x16xbf16, #tpu.memory_space<vmem>>, vector<32x16xbf16>
    %c0_15 = arith.constant 0 : index
    %c0_16 = arith.constant 0 : index
    %13 = vector.load %arg8[%c0_15, %c0_16] : memref<1x16xf32, #tpu.memory_space<vmem>>, vector<1x16xf32>
    %cst_17 = arith.constant 0.000000e+00 : f32
    %14 = vector.broadcast %cst_17 : f32 to vector<8x16xf32>
    %15 = vector.extract_strided_slice %3 {offsets = [0, 0], sizes = [8, 8], strides = [1, 1]} : vector<16x32xbf16> to vector<8x8xbf16>
    %16 = vector.extract_strided_slice %7 {offsets = [0, 0], sizes = [8, 8], strides = [1, 1]} : vector<16x32xbf16> to vector<8x8xbf16>
    %17 = vector.extract_strided_slice %11 {offsets = [0, 0], sizes = [8, 8], strides = [1, 1]} : vector<16x32xbf16> to vector<8x8xbf16>
    %cst_18 = arith.constant dense<0.000000e+00> : vector<8x8xf32>
    %18 = tpu.matmul %15, %16, %cst_18 {dimension_numbers = #tpu.dot_dimension_numbers<[1], [1], [0], [0], [0, 0, 1, 0], [], []>} : vector<8x8xbf16>, vector<8x8xbf16>, vector<8x8xf32> -> vector<8x8xf32>
    %cst_19 = arith.constant dense<0xFF800000> : vector<8xf32>
    %19 = vector.multi_reduction <maximumf>, %18, %cst_19 [1] : vector<8x8xf32> to vector<8xf32>
    %20 = vector.shape_cast %19 : vector<8xf32> to vector<8x1xf32>
    %21 = vector.broadcast %20 : vector<8x1xf32> to vector<8x8xf32>
    %22 = arith.subf %18, %21 : vector<8x8xf32>
    %23 = math.exp %22 : vector<8x8xf32>
    %cst_20 = arith.constant dense<0.000000e+00> : vector<8xf32>
    %24 = vector.multi_reduction <add>, %23, %cst_20 [1] : vector<8x8xf32> to vector<8xf32>
    %25 = vector.shape_cast %24 : vector<8xf32> to vector<8x1xf32>
    %26 = tpu.reciprocal %25 {approx = true} : vector<8x1xf32> -> vector<8x1xf32>
    %27 = vector.broadcast %26 : vector<8x1xf32> to vector<8x8xf32>
    %28 = arith.mulf %23, %27 : vector<8x8xf32>
    %29 = arith.truncf %28 : vector<8x8xf32> to vector<8x8xbf16>
    %cst_21 = arith.constant dense<0.000000e+00> : vector<8x8xf32>
    %30 = tpu.matmul %29, %17, %cst_21 {dimension_numbers = #tpu.dot_dimension_numbers<[1], [0], [0], [1], [0, 0, 1, 1], [], []>} : vector<8x8xbf16>, vector<8x8xbf16>, vector<8x8xf32> -> vector<8x8xf32>
    %31 = arith.truncf %30 : vector<8x8xf32> to vector<8x8xbf16>
    %32 = vector.extract_strided_slice %12 {offsets = [0, 0], sizes = [8, 16], strides = [1, 1]} : vector<32x16xbf16> to vector<8x16xbf16>
    %cst_22 = arith.constant dense<0.000000e+00> : vector<8x16xf32>
    %33 = tpu.matmul %31, %32, %cst_22 {dimension_numbers = #tpu.dot_dimension_numbers<[1], [0], [0], [1], [0, 0, 1, 1], [], []>} : vector<8x8xbf16>, vector<8x16xbf16>, vector<8x16xf32> -> vector<8x16xf32>
    %34 = arith.addf %14, %33 : vector<8x16xf32>
    %35 = vector.extract_strided_slice %3 {offsets = [0, 8], sizes = [8, 8], strides = [1, 1]} : vector<16x32xbf16> to vector<8x8xbf16>
    %36 = vector.extract_strided_slice %7 {offsets = [0, 8], sizes = [8, 8], strides = [1, 1]} : vector<16x32xbf16> to vector<8x8xbf16>
    %37 = vector.extract_strided_slice %11 {offsets = [0, 8], sizes = [8, 8], strides = [1, 1]} : vector<16x32xbf16> to vector<8x8xbf16>
    %cst_23 = arith.constant dense<0.000000e+00> : vector<8x8xf32>
    %38 = tpu.matmul %35, %36, %cst_23 {dimension_numbers = #tpu.dot_dimension_numbers<[1], [1], [0], [0], [0, 0, 1, 0], [], []>} : vector<8x8xbf16>, vector<8x8xbf16>, vector<8x8xf32> -> vector<8x8xf32>
    %cst_24 = arith.constant dense<0xFF800000> : vector<8xf32>
    %39 = vector.multi_reduction <maximumf>, %38, %cst_24 [1] : vector<8x8xf32> to vector<8xf32>
    %40 = vector.shape_cast %39 : vector<8xf32> to vector<8x1xf32>
    %41 = vector.broadcast %40 : vector<8x1xf32> to vector<8x8xf32>
    %42 = arith.subf %38, %41 : vector<8x8xf32>
    %43 = math.exp %42 : vector<8x8xf32>
    %cst_25 = arith.constant dense<0.000000e+00> : vector<8xf32>
    %44 = vector.multi_reduction <add>, %43, %cst_25 [1] : vector<8x8xf32> to vector<8xf32>
    %45 = vector.shape_cast %44 : vector<8xf32> to vector<8x1xf32>
    %46 = tpu.reciprocal %45 {approx = true} : vector<8x1xf32> -> vector<8x1xf32>
    %47 = vector.broadcast %46 : vector<8x1xf32> to vector<8x8xf32>
    %48 = arith.mulf %43, %47 : vector<8x8xf32>
    %49 = arith.truncf %48 : vector<8x8xf32> to vector<8x8xbf16>
    %cst_26 = arith.constant dense<0.000000e+00> : vector<8x8xf32>
    %50 = tpu.matmul %49, %37, %cst_26 {dimension_numbers = #tpu.dot_dimension_numbers<[1], [0], [0], [1], [0, 0, 1, 1], [], []>} : vector<8x8xbf16>, vector<8x8xbf16>, vector<8x8xf32> -> vector<8x8xf32>
    %51 = arith.truncf %50 : vector<8x8xf32> to vector<8x8xbf16>
    %52 = vector.extract_strided_slice %12 {offsets = [8, 0], sizes = [8, 16], strides = [1, 1]} : vector<32x16xbf16> to vector<8x16xbf16>
    %cst_27 = arith.constant dense<0.000000e+00> : vector<8x16xf32>
    %53 = tpu.matmul %51, %52, %cst_27 {dimension_numbers = #tpu.dot_dimension_numbers<[1], [0], [0], [1], [0, 0, 1, 1], [], []>} : vector<8x8xbf16>, vector<8x16xbf16>, vector<8x16xf32> -> vector<8x16xf32>
    %54 = arith.addf %34, %53 : vector<8x16xf32>
    %55 = vector.extract_strided_slice %3 {offsets = [0, 16], sizes = [8, 8], strides = [1, 1]} : vector<16x32xbf16> to vector<8x8xbf16>
    %56 = vector.extract_strided_slice %7 {offsets = [0, 16], sizes = [8, 8], strides = [1, 1]} : vector<16x32xbf16> to vector<8x8xbf16>
    %57 = vector.extract_strided_slice %11 {offsets = [0, 16], sizes = [8, 8], strides = [1, 1]} : vector<16x32xbf16> to vector<8x8xbf16>
    %cst_28 = arith.constant dense<0.000000e+00> : vector<8x8xf32>
    %58 = tpu.matmul %55, %56, %cst_28 {dimension_numbers = #tpu.dot_dimension_numbers<[1], [1], [0], [0], [0, 0, 1, 0], [], []>} : vector<8x8xbf16>, vector<8x8xbf16>, vector<8x8xf32> -> vector<8x8xf32>
    %cst_29 = arith.constant dense<0xFF800000> : vector<8xf32>
    %59 = vector.multi_reduction <maximumf>, %58, %cst_29 [1] : vector<8x8xf32> to vector<8xf32>
    %60 = vector.shape_cast %59 : vector<8xf32> to vector<8x1xf32>
    %61 = vector.broadcast %60 : vector<8x1xf32> to vector<8x8xf32>
    %62 = arith.subf %58, %61 : vector<8x8xf32>
    %63 = math.exp %62 : vector<8x8xf32>
    %cst_30 = arith.constant dense<0.000000e+00> : vector<8xf32>
    %64 = vector.multi_reduction <add>, %63, %cst_30 [1] : vector<8x8xf32> to vector<8xf32>
    %65 = vector.shape_cast %64 : vector<8xf32> to vector<8x1xf32>
    %66 = tpu.reciprocal %65 {approx = true} : vector<8x1xf32> -> vector<8x1xf32>
    %67 = vector.broadcast %66 : vector<8x1xf32> to vector<8x8xf32>
    %68 = arith.mulf %63, %67 : vector<8x8xf32>
    %69 = arith.truncf %68 : vector<8x8xf32> to vector<8x8xbf16>
    %cst_31 = arith.constant dense<0.000000e+00> : vector<8x8xf32>
    %70 = tpu.matmul %69, %57, %cst_31 {dimension_numbers = #tpu.dot_dimension_numbers<[1], [0], [0], [1], [0, 0, 1, 1], [], []>} : vector<8x8xbf16>, vector<8x8xbf16>, vector<8x8xf32> -> vector<8x8xf32>
    %71 = arith.truncf %70 : vector<8x8xf32> to vector<8x8xbf16>
    %72 = vector.extract_strided_slice %12 {offsets = [16, 0], sizes = [8, 16], strides = [1, 1]} : vector<32x16xbf16> to vector<8x16xbf16>
    %cst_32 = arith.constant dense<0.000000e+00> : vector<8x16xf32>
    %73 = tpu.matmul %71, %72, %cst_32 {dimension_numbers = #tpu.dot_dimension_numbers<[1], [0], [0], [1], [0, 0, 1, 1], [], []>} : vector<8x8xbf16>, vector<8x16xbf16>, vector<8x16xf32> -> vector<8x16xf32>
    %74 = arith.addf %54, %73 : vector<8x16xf32>
    %75 = vector.extract_strided_slice %3 {offsets = [0, 24], sizes = [8, 8], strides = [1, 1]} : vector<16x32xbf16> to vector<8x8xbf16>
    %76 = vector.extract_strided_slice %7 {offsets = [0, 24], sizes = [8, 8], strides = [1, 1]} : vector<16x32xbf16> to vector<8x8xbf16>
    %77 = vector.extract_strided_slice %11 {offsets = [0, 24], sizes = [8, 8], strides = [1, 1]} : vector<16x32xbf16> to vector<8x8xbf16>
    %cst_33 = arith.constant dense<0.000000e+00> : vector<8x8xf32>
    %78 = tpu.matmul %75, %76, %cst_33 {dimension_numbers = #tpu.dot_dimension_numbers<[1], [1], [0], [0], [0, 0, 1, 0], [], []>} : vector<8x8xbf16>, vector<8x8xbf16>, vector<8x8xf32> -> vector<8x8xf32>
    %cst_34 = arith.constant dense<0xFF800000> : vector<8xf32>
    %79 = vector.multi_reduction <maximumf>, %78, %cst_34 [1] : vector<8x8xf32> to vector<8xf32>
    %80 = vector.shape_cast %79 : vector<8xf32> to vector<8x1xf32>
    %81 = vector.broadcast %80 : vector<8x1xf32> to vector<8x8xf32>
    %82 = arith.subf %78, %81 : vector<8x8xf32>
    %83 = math.exp %82 : vector<8x8xf32>
    %cst_35 = arith.constant dense<0.000000e+00> : vector<8xf32>
    %84 = vector.multi_reduction <add>, %83, %cst_35 [1] : vector<8x8xf32> to vector<8xf32>
    %85 = vector.shape_cast %84 : vector<8xf32> to vector<8x1xf32>
    %86 = tpu.reciprocal %85 {approx = true} : vector<8x1xf32> -> vector<8x1xf32>
    %87 = vector.broadcast %86 : vector<8x1xf32> to vector<8x8xf32>
    %88 = arith.mulf %83, %87 : vector<8x8xf32>
    %89 = arith.truncf %88 : vector<8x8xf32> to vector<8x8xbf16>
    %cst_36 = arith.constant dense<0.000000e+00> : vector<8x8xf32>
    %90 = tpu.matmul %89, %77, %cst_36 {dimension_numbers = #tpu.dot_dimension_numbers<[1], [0], [0], [1], [0, 0, 1, 1], [], []>} : vector<8x8xbf16>, vector<8x8xbf16>, vector<8x8xf32> -> vector<8x8xf32>
    %91 = arith.truncf %90 : vector<8x8xf32> to vector<8x8xbf16>
    %92 = vector.extract_strided_slice %12 {offsets = [24, 0], sizes = [8, 16], strides = [1, 1]} : vector<32x16xbf16> to vector<8x16xbf16>
    %cst_37 = arith.constant dense<0.000000e+00> : vector<8x16xf32>
    %93 = tpu.matmul %91, %92, %cst_37 {dimension_numbers = #tpu.dot_dimension_numbers<[1], [0], [0], [1], [0, 0, 1, 1], [], []>} : vector<8x8xbf16>, vector<8x16xbf16>, vector<8x16xf32> -> vector<8x16xf32>
    %94 = arith.addf %74, %93 : vector<8x16xf32>
    %95 = vector.broadcast %13 : vector<1x16xf32> to vector<8x16xf32>
    %96 = arith.addf %94, %95 : vector<8x16xf32>
    %c0_38 = arith.constant 0 : index
    %c0_39 = arith.constant 0 : index
    %97 = vector.load %arg9[%c0_38, %c0_39] : memref<16x16xf32, #tpu.memory_space<vmem>>, vector<8x16xf32>
    tpu.vector_store %arg9[%c0_38, %c0_39], %96 {strides = array<i32>} : memref<16x16xf32, #tpu.memory_space<vmem>>, vector<8x16xf32>,
    %cst_40 = arith.constant 0.000000e+00 : f32
    %98 = vector.broadcast %cst_40 : f32 to vector<8x16xf32>
    %99 = vector.extract_strided_slice %3 {offsets = [8, 0], sizes = [8, 8], strides = [1, 1]} : vector<16x32xbf16> to vector<8x8xbf16>
    %100 = vector.extract_strided_slice %7 {offsets = [8, 0], sizes = [8, 8], strides = [1, 1]} : vector<16x32xbf16> to vector<8x8xbf16>
    %101 = vector.extract_strided_slice %11 {offsets = [8, 0], sizes = [8, 8], strides = [1, 1]} : vector<16x32xbf16> to vector<8x8xbf16>
    %cst_41 = arith.constant dense<0.000000e+00> : vector<8x8xf32>
    %102 = tpu.matmul %99, %100, %cst_41 {dimension_numbers = #tpu.dot_dimension_numbers<[1], [1], [0], [0], [0, 0, 1, 0], [], []>} : vector<8x8xbf16>, vector<8x8xbf16>, vector<8x8xf32> -> vector<8x8xf32>
    %cst_42 = arith.constant dense<0xFF800000> : vector<8xf32>
    %103 = vector.multi_reduction <maximumf>, %102, %cst_42 [1] : vector<8x8xf32> to vector<8xf32>
    %104 = vector.shape_cast %103 : vector<8xf32> to vector<8x1xf32>
    %105 = vector.broadcast %104 : vector<8x1xf32> to vector<8x8xf32>
    %106 = arith.subf %102, %105 : vector<8x8xf32>
    %107 = math.exp %106 : vector<8x8xf32>
    %cst_43 = arith.constant dense<0.000000e+00> : vector<8xf32>
    %108 = vector.multi_reduction <add>, %107, %cst_43 [1] : vector<8x8xf32> to vector<8xf32>
    %109 = vector.shape_cast %108 : vector<8xf32> to vector<8x1xf32>
    %110 = tpu.reciprocal %109 {approx = true} : vector<8x1xf32> -> vector<8x1xf32>
    %111 = vector.broadcast %110 : vector<8x1xf32> to vector<8x8xf32>
    %112 = arith.mulf %107, %111 : vector<8x8xf32>
    %113 = arith.truncf %112 : vector<8x8xf32> to vector<8x8xbf16>
    %cst_44 = arith.constant dense<0.000000e+00> : vector<8x8xf32>
    %114 = tpu.matmul %113, %101, %cst_44 {dimension_numbers = #tpu.dot_dimension_numbers<[1], [0], [0], [1], [0, 0, 1, 1], [], []>} : vector<8x8xbf16>, vector<8x8xbf16>, vector<8x8xf32> -> vector<8x8xf32>
    %115 = arith.truncf %114 : vector<8x8xf32> to vector<8x8xbf16>
    %116 = vector.extract_strided_slice %12 {offsets = [0, 0], sizes = [8, 16], strides = [1, 1]} : vector<32x16xbf16> to vector<8x16xbf16>
    %cst_45 = arith.constant dense<0.000000e+00> : vector<8x16xf32>
    %117 = tpu.matmul %115, %116, %cst_45 {dimension_numbers = #tpu.dot_dimension_numbers<[1], [0], [0], [1], [0, 0, 1, 1], [], []>} : vector<8x8xbf16>, vector<8x16xbf16>, vector<8x16xf32> -> vector<8x16xf32>
    %118 = arith.addf %98, %117 : vector<8x16xf32>
    %119 = vector.extract_strided_slice %3 {offsets = [8, 8], sizes = [8, 8], strides = [1, 1]} : vector<16x32xbf16> to vector<8x8xbf16>
    %120 = vector.extract_strided_slice %7 {offsets = [8, 8], sizes = [8, 8], strides = [1, 1]} : vector<16x32xbf16> to vector<8x8xbf16>
    %121 = vector.extract_strided_slice %11 {offsets = [8, 8], sizes = [8, 8], strides = [1, 1]} : vector<16x32xbf16> to vector<8x8xbf16>
    %cst_46 = arith.constant dense<0.000000e+00> : vector<8x8xf32>
    %122 = tpu.matmul %119, %120, %cst_46 {dimension_numbers = #tpu.dot_dimension_numbers<[1], [1], [0], [0], [0, 0, 1, 0], [], []>} : vector<8x8xbf16>, vector<8x8xbf16>, vector<8x8xf32> -> vector<8x8xf32>
    %cst_47 = arith.constant dense<0xFF800000> : vector<8xf32>
    %123 = vector.multi_reduction <maximumf>, %122, %cst_47 [1] : vector<8x8xf32> to vector<8xf32>
    %124 = vector.shape_cast %123 : vector<8xf32> to vector<8x1xf32>
    %125 = vector.broadcast %124 : vector<8x1xf32> to vector<8x8xf32>
    %126 = arith.subf %122, %125 : vector<8x8xf32>
    %127 = math.exp %126 : vector<8x8xf32>
    %cst_48 = arith.constant dense<0.000000e+00> : vector<8xf32>
    %128 = vector.multi_reduction <add>, %127, %cst_48 [1] : vector<8x8xf32> to vector<8xf32>
    %129 = vector.shape_cast %128 : vector<8xf32> to vector<8x1xf32>
    %130 = tpu.reciprocal %129 {approx = true} : vector<8x1xf32> -> vector<8x1xf32>
    %131 = vector.broadcast %130 : vector<8x1xf32> to vector<8x8xf32>
    %132 = arith.mulf %127, %131 : vector<8x8xf32>
    %133 = arith.truncf %132 : vector<8x8xf32> to vector<8x8xbf16>
    %cst_49 = arith.constant dense<0.000000e+00> : vector<8x8xf32>
    %134 = tpu.matmul %133, %121, %cst_49 {dimension_numbers = #tpu.dot_dimension_numbers<[1], [0], [0], [1], [0, 0, 1, 1], [], []>} : vector<8x8xbf16>, vector<8x8xbf16>, vector<8x8xf32> -> vector<8x8xf32>
    %135 = arith.truncf %134 : vector<8x8xf32> to vector<8x8xbf16>
    %136 = vector.extract_strided_slice %12 {offsets = [8, 0], sizes = [8, 16], strides = [1, 1]} : vector<32x16xbf16> to vector<8x16xbf16>
    %cst_50 = arith.constant dense<0.000000e+00> : vector<8x16xf32>
    %137 = tpu.matmul %135, %136, %cst_50 {dimension_numbers = #tpu.dot_dimension_numbers<[1], [0], [0], [1], [0, 0, 1, 1], [], []>} : vector<8x8xbf16>, vector<8x16xbf16>, vector<8x16xf32> -> vector<8x16xf32>
    %138 = arith.addf %118, %137 : vector<8x16xf32>
    %139 = vector.extract_strided_slice %3 {offsets = [8, 16], sizes = [8, 8], strides = [1, 1]} : vector<16x32xbf16> to vector<8x8xbf16>
    %140 = vector.extract_strided_slice %7 {offsets = [8, 16], sizes = [8, 8], strides = [1, 1]} : vector<16x32xbf16> to vector<8x8xbf16>
    %141 = vector.extract_strided_slice %11 {offsets = [8, 16], sizes = [8, 8], strides = [1, 1]} : vector<16x32xbf16> to vector<8x8xbf16>
    %cst_51 = arith.constant dense<0.000000e+00> : vector<8x8xf32>
    %142 = tpu.matmul %139, %140, %cst_51 {dimension_numbers = #tpu.dot_dimension_numbers<[1], [1], [0], [0], [0, 0, 1, 0], [], []>} : vector<8x8xbf16>, vector<8x8xbf16>, vector<8x8xf32> -> vector<8x8xf32>
    %cst_52 = arith.constant dense<0xFF800000> : vector<8xf32>
    %143 = vector.multi_reduction <maximumf>, %142, %cst_52 [1] : vector<8x8xf32> to vector<8xf32>
    %144 = vector.shape_cast %143 : vector<8xf32> to vector<8x1xf32>
    %145 = vector.broadcast %144 : vector<8x1xf32> to vector<8x8xf32>
    %146 = arith.subf %142, %145 : vector<8x8xf32>
    %147 = math.exp %146 : vector<8x8xf32>
    %cst_53 = arith.constant dense<0.000000e+00> : vector<8xf32>
    %148 = vector.multi_reduction <add>, %147, %cst_53 [1] : vector<8x8xf32> to vector<8xf32>
    %149 = vector.shape_cast %148 : vector<8xf32> to vector<8x1xf32>
    %150 = tpu.reciprocal %149 {approx = true} : vector<8x1xf32> -> vector<8x1xf32>
    %151 = vector.broadcast %150 : vector<8x1xf32> to vector<8x8xf32>
    %152 = arith.mulf %147, %151 : vector<8x8xf32>
    %153 = arith.truncf %152 : vector<8x8xf32> to vector<8x8xbf16>
    %cst_54 = arith.constant dense<0.000000e+00> : vector<8x8xf32>
    %154 = tpu.matmul %153, %141, %cst_54 {dimension_numbers = #tpu.dot_dimension_numbers<[1], [0], [0], [1], [0, 0, 1, 1], [], []>} : vector<8x8xbf16>, vector<8x8xbf16>, vector<8x8xf32> -> vector<8x8xf32>
    %155 = arith.truncf %154 : vector<8x8xf32> to vector<8x8xbf16>
    %156 = vector.extract_strided_slice %12 {offsets = [16, 0], sizes = [8, 16], strides = [1, 1]} : vector<32x16xbf16> to vector<8x16xbf16>
    %cst_55 = arith.constant dense<0.000000e+00> : vector<8x16xf32>
    %157 = tpu.matmul %155, %156, %cst_55 {dimension_numbers = #tpu.dot_dimension_numbers<[1], [0], [0], [1], [0, 0, 1, 1], [], []>} : vector<8x8xbf16>, vector<8x16xbf16>, vector<8x16xf32> -> vector<8x16xf32>
    %158 = arith.addf %138, %157 : vector<8x16xf32>
    %159 = vector.extract_strided_slice %3 {offsets = [8, 24], sizes = [8, 8], strides = [1, 1]} : vector<16x32xbf16> to vector<8x8xbf16>
    %160 = vector.extract_strided_slice %7 {offsets = [8, 24], sizes = [8, 8], strides = [1, 1]} : vector<16x32xbf16> to vector<8x8xbf16>
    %161 = vector.extract_strided_slice %11 {offsets = [8, 24], sizes = [8, 8], strides = [1, 1]} : vector<16x32xbf16> to vector<8x8xbf16>
    %cst_56 = arith.constant dense<0.000000e+00> : vector<8x8xf32>
    %162 = tpu.matmul %159, %160, %cst_56 {dimension_numbers = #tpu.dot_dimension_numbers<[1], [1], [0], [0], [0, 0, 1, 0], [], []>} : vector<8x8xbf16>, vector<8x8xbf16>, vector<8x8xf32> -> vector<8x8xf32>
    %cst_57 = arith.constant dense<0xFF800000> : vector<8xf32>
    %163 = vector.multi_reduction <maximumf>, %162, %cst_57 [1] : vector<8x8xf32> to vector<8xf32>
    %164 = vector.shape_cast %163 : vector<8xf32> to vector<8x1xf32>
    %165 = vector.broadcast %164 : vector<8x1xf32> to vector<8x8xf32>
    %166 = arith.subf %162, %165 : vector<8x8xf32>
    %167 = math.exp %166 : vector<8x8xf32>
    %cst_58 = arith.constant dense<0.000000e+00> : vector<8xf32>
    %168 = vector.multi_reduction <add>, %167, %cst_58 [1] : vector<8x8xf32> to vector<8xf32>
    %169 = vector.shape_cast %168 : vector<8xf32> to vector<8x1xf32>
    %170 = tpu.reciprocal %169 {approx = true} : vector<8x1xf32> -> vector<8x1xf32>
    %171 = vector.broadcast %170 : vector<8x1xf32> to vector<8x8xf32>
    %172 = arith.mulf %167, %171 : vector<8x8xf32>
    %173 = arith.truncf %172 : vector<8x8xf32> to vector<8x8xbf16>
    %cst_59 = arith.constant dense<0.000000e+00> : vector<8x8xf32>
    %174 = tpu.matmul %173, %161, %cst_59 {dimension_numbers = #tpu.dot_dimension_numbers<[1], [0], [0], [1], [0, 0, 1, 1], [], []>} : vector<8x8xbf16>, vector<8x8xbf16>, vector<8x8xf32> -> vector<8x8xf32>
    %175 = arith.truncf %174 : vector<8x8xf32> to vector<8x8xbf16>
    %176 = vector.extract_strided_slice %12 {offsets = [24, 0], sizes = [8, 16], strides = [1, 1]} : vector<32x16xbf16> to vector<8x16xbf16>
    %cst_60 = arith.constant dense<0.000000e+00> : vector<8x16xf32>
    %177 = tpu.matmul %175, %176, %cst_60 {dimension_numbers = #tpu.dot_dimension_numbers<[1], [0], [0], [1], [0, 0, 1, 1], [], []>} : vector<8x8xbf16>, vector<8x16xbf16>, vector<8x16xf32> -> vector<8x16xf32>
    %178 = arith.addf %158, %177 : vector<8x16xf32>
    %179 = vector.broadcast %13 : vector<1x16xf32> to vector<8x16xf32>
    %180 = arith.addf %178, %179 : vector<8x16xf32>
    %c8 = arith.constant 8 : index
    %c0_61 = arith.constant 0 : index
    %181 = vector.load %arg9[%c8, %c0_61] : memref<16x16xf32, #tpu.memory_space<vmem>>, vector<8x16xf32>
    tpu.vector_store %arg9[%c8, %c0_61], %180 {strides = array<i32>} : memref<16x16xf32, #tpu.memory_space<vmem>>, vector<8x16xf32>,
    return
  }
  func.func @transform_0(%arg0: i32) -> (i32, i32) {
    %c0_i32 = arith.constant 0 : i32
    %c0_i32_0 = arith.constant 0 : i32
    %c0_i32_1 = arith.constant 0 : i32
    return %c0_i32, %c0_i32_0 : i32, i32
  }
  func.func @transform_1(%arg0: i32) -> (i32, i32) {
    %c0_i32 = arith.constant 0 : i32
    %c0_i32_0 = arith.constant 0 : i32
    %c0_i32_1 = arith.constant 0 : i32
    return %c0_i32, %c0_i32_0 : i32, i32
  }
  func.func @transform_2(%arg0: i32) -> (i32, i32) {
    %c0_i32 = arith.constant 0 : i32
    %c0_i32_0 = arith.constant 0 : i32
    %c0_i32_1 = arith.constant 0 : i32
    return %c0_i32, %c0_i32_0 : i32, i32
  }
  func.func @transform_3(%arg0: i32) -> (i32, i32) {
    %c0_i32 = arith.constant 0 : i32
    %c0_i32_0 = arith.constant 0 : i32
    %c0_i32_1 = arith.constant 0 : i32
    return %c0_i32, %c0_i32_0 : i32, i32
  }
  func.func @transform_4(%arg0: i32) -> (i32, i32) {
    %c0_i32 = arith.constant 0 : i32
    %c0_i32_0 = arith.constant 0 : i32
    %c0_i32_1 = arith.constant 0 : i32
    return %c0_i32, %c0_i32_0 : i32, i32
  }
  func.func @transform_5(%arg0: i32) -> (i32, i32) {
    %c0_i32 = arith.constant 0 : i32
    %c0_i32_0 = arith.constant 0 : i32
    %c0_i32_1 = arith.constant 0 : i32
    return %c0_i32, %c0_i32_0 : i32, i32
  }
  func.func @transform_6(%arg0: i32) -> (i32, i32) {
    %c0_i32 = arith.constant 0 : i32
    %c0_i32_0 = arith.constant 0 : i32
    %c0_i32_1 = arith.constant 0 : i32
    return %c0_i32, %c0_i32_0 : i32, i32
  }
  func.func @transform_7(%arg0: i32) -> (i32, i32) {
    %c0_i32 = arith.constant 0 : i32
    %c0_i32_0 = arith.constant 0 : i32
    %c0_i32_1 = arith.constant 0 : i32
    return %c0_i32, %c0_i32_0 : i32, i32
  }
  func.func @transform_8(%arg0: i32) -> (i32, i32) {
    %c0_i32 = arith.constant 0 : i32
    %c0_i32_0 = arith.constant 0 : i32
    %c0_i32_1 = arith.constant 0 : i32
    return %c0_i32, %c0_i32_0 : i32, i32
  }
}

</mosaic_0001>

<llo_original>
// kernel: tpu_custom_call.1
$region0: #{tpu_custom_call.1}
  #allocation0 [shape = 'u32[]', space=smem, size = 0x4, offset = 0x4, fixed_abs, tag = 'smem constant byte address 0x4 - core index']
  #allocation1 [shape = 'u32[72,128]{1,0:T(1,128)}', space=vmem, size = 0x9000, scoped, tag = 'internal scratch']
  %s0 = inlined_call_operand.vmem [shape: bf16[16,16], index: 0, kind: input, shape index: {}]
  %s1 = inlined_call_operand.vmem [shape: bf16[16,16], index: 1, kind: input, shape index: {}]
  %s2 = inlined_call_operand.vmem [shape: bf16[16,16], index: 2, kind: input, shape index: {}]
  %s3 = inlined_call_operand.hbm [shape: bf16[16,32], index: 3, kind: input, shape index: {}]
  %s4 = inlined_call_operand.hbm [shape: bf16[16,32], index: 4, kind: input, shape index: {}]
  %s5 = inlined_call_operand.hbm [shape: bf16[16,32], index: 5, kind: input, shape index: {}]
  %s6 = inlined_call_operand.vmem [shape: bf16[32,16], index: 6, kind: input, shape index: {}]
  %s7 = inlined_call_operand.vmem [shape: f32[1,16], index: 7, kind: input, shape index: {}]
  %s8 = inlined_call_operand.hbm [shape: f32[16,16], index: 8, kind: output, shape index: {}]
  %s9 = sld [smem:[#allocation0]]
  $region54: #{tpu_custom_call.1} parent=0
    _
  %s11 = ssub.s32 1, %s9
  %s12 = scalar_select 0, %s11, %s9
  $region1: #{tpu_custom_call.1} parent=0
    #allocation2 [shape = 'u8[4096]{0}', space=vmem, size = 0x1000, scoped, tag = 'input window, operand 3, single buffered']
    #allocation3 [shape = 's32[1]{0}', space=sflag, size = 0x4, scoped, tag = 'scoped memory for tpu_custom_call.1']
    #allocation4 [shape = 's32[1]{0}', space=sflag, size = 0x4, scoped, tag = 'scoped memory for tpu_custom_call.1']
    #allocation5 [shape = 'u8[4096]{0}', space=vmem, size = 0x1000, scoped, tag = 'input window, operand 4, single buffered']
    #allocation6 [shape = 's32[1]{0}', space=sflag, size = 0x4, scoped, tag = 'scoped memory for tpu_custom_call.1']
    #allocation7 [shape = 'u8[4096]{0}', space=vmem, size = 0x1000, scoped, tag = 'input window, operand 5, single buffered']
    #allocation8 [shape = 'u8[8192]{0}', space=vmem, size = 0x2000, scoped, tag = 'output window, operand 0, single buffered']
    %13 = vsyncpa [#allocation3], 0
    %14 = vsyncpa [#allocation6], 0
    %15 = vsyncpa [#allocation4], 0
    // Predicated region
    $region2: #{tpu_custom_call.1} parent=1 // pred_check
      _
    $region3: #{tpu_custom_call.1} parent=1 // pred_check_branch
      %17 = sbr.rel (0) target = $region5
    $region4: #{tpu_custom_call.1} parent=1 // pred_region
      _
    $region5: #{tpu_custom_call.1} parent=1 // pred_fallthru
      _
    // Predicated region
    $region6: #{tpu_custom_call.1} parent=1 // pred_check
      _
    $region7: #{tpu_custom_call.1} parent=1 // pred_check_branch
      %19 = sbr.rel (0) target = $region9
    $region8: #{tpu_custom_call.1} parent=1 // pred_region
      _
    $region9: #{tpu_custom_call.1} parent=1 // pred_fallthru
      _
    // Predicated region
    $region10: #{tpu_custom_call.1} parent=1 // pred_check
      _
    $region11: #{tpu_custom_call.1} parent=1 // pred_check_branch
      %21 = sbr.rel (0) target = $region13
    $region12: #{tpu_custom_call.1} parent=1 // pred_region
      _
    $region13: #{tpu_custom_call.1} parent=1 // pred_fallthru
      _
    // Predicated region
    $region14: #{tpu_custom_call.1} parent=1 // pred_check
      _
    $region15: #{tpu_custom_call.1} parent=1 // pred_check_branch
      %23 = sbr.rel (0) target = $region17
    $region16: #{tpu_custom_call.1} parent=1 // pred_region
      %25 = vsyncadd [#allocation3], 0
      %s26 = sshll.u32 %s3, 4
      %s27 = int_to_ptr.hbm [resolvable:$true] %s26
      %s28 = sshll.u32 [#allocation2], 4
      %s29 = int_to_ptr.vmem [resolvable:$true] %s28
      %34 = dma.hbm_to_vmem [thread:$0]  %s27, 128, %s29, [#allocation3], 64, 64, 4
    $region17: #{tpu_custom_call.1} parent=1 // pred_fallthru
      _
    // Predicated region
    $region18: #{tpu_custom_call.1} parent=1 // pred_check
      _
    $region19: #{tpu_custom_call.1} parent=1 // pred_check_branch
      %36 = sbr.rel (0) target = $region21
    $region20: #{tpu_custom_call.1} parent=1 // pred_region
      %38 = vsyncadd [#allocation6], 0
      %s39 = sshll.u32 %s4, 4
      %s40 = int_to_ptr.hbm [resolvable:$true] %s39
      %s41 = sshll.u32 [#allocation5], 4
      %s42 = int_to_ptr.vmem [resolvable:$true] %s41
      %47 = dma.hbm_to_vmem [thread:$0]  %s40, 128, %s42, [#allocation6], 64, 64, 4
    $region21: #{tpu_custom_call.1} parent=1 // pred_fallthru
      _
    // Predicated region
    $region22: #{tpu_custom_call.1} parent=1 // pred_check
      _
    $region23: #{tpu_custom_call.1} parent=1 // pred_check_branch
      %49 = sbr.rel (0) target = $region25
    $region24: #{tpu_custom_call.1} parent=1 // pred_region
      %51 = vsyncadd [#allocation6], 0
      %s52 = sshll.u32 %s5, 4
      %s53 = int_to_ptr.hbm [resolvable:$true] %s52
      %s54 = sshll.u32 [#allocation7], 4
      %s55 = int_to_ptr.vmem [resolvable:$true] %s54
      %60 = dma.hbm_to_vmem [thread:$0]  %s53, 128, %s55, [#allocation6], 64, 64, 4
    $region25: #{tpu_custom_call.1} parent=1 // pred_fallthru
      _
    // Predicated region
    $region26: #{tpu_custom_call.1} parent=1 // pred_check
      _
    $region27: #{tpu_custom_call.1} parent=1 // pred_check_branch
      %62 = sbr.rel (0) target = $region29
    $region28: #{tpu_custom_call.1} parent=1 // pred_region
      _
    $region29: #{tpu_custom_call.1} parent=1 // pred_fallthru
      _
    // Predicated region
    $region30: #{tpu_custom_call.1} parent=1 // pred_check
      _
    $region31: #{tpu_custom_call.1} parent=1 // pred_check_branch
      %64 = sbr.rel (0) target = $region33
    $region32: #{tpu_custom_call.1} parent=1 // pred_region
      _
    $region33: #{tpu_custom_call.1} parent=1 // pred_fallthru
      _
    // Predicated region
    $region34: #{tpu_custom_call.1} parent=1 // pred_check
      _
    $region35: #{tpu_custom_call.1} parent=1 // pred_check_branch
      %66 = sbr.rel (0) target = $region37
    $region36: #{tpu_custom_call.1} parent=1 // pred_region
      %68 = dma.done [#allocation3], 128
    $region37: #{tpu_custom_call.1} parent=1 // pred_fallthru
      _
    // Predicated region
    $region38: #{tpu_custom_call.1} parent=1 // pred_check
      _
    $region39: #{tpu_custom_call.1} parent=1 // pred_check_branch
      %70 = sbr.rel (0) target = $region41
    $region40: #{tpu_custom_call.1} parent=1 // pred_region
      %72 = dma.done [#allocation6], 128
    $region41: #{tpu_custom_call.1} parent=1 // pred_fallthru
      _
    // Predicated region
    $region42: #{tpu_custom_call.1} parent=1 // pred_check
      _
    $region43: #{tpu_custom_call.1} parent=1 // pred_check_branch
      %74 = sbr.rel (0) target = $region45
    $region44: #{tpu_custom_call.1} parent=1 // pred_region
      %76 = dma.done [#allocation6], 128
    $region45: #{tpu_custom_call.1} parent=1 // pred_fallthru
      _
    %v78 = vld [vmem:[%s0] sm:$0xf]
    %v79 = vld [vmem:[%s0 + $0x4] sm:$0xf]
    %v80 = vld [vmem:[#allocation2] sm:$0xf]
    %v81 = vld [vmem:[#allocation2 + $0x4] sm:$0xf]
    %v84 = vunpack.c.l.b16 %v78
    %v85 = vunpack.c.l.b16 %v79
    %v86 = vpack.c.b16 %v85, %v84
    %v89 = vunpack.c.l.b16 %v80
    %v90 = vunpack.c.l.b16 %v81
    %v91 = vpack.c.b16 %v90, %v89
    %vm93 = vcmask 130048
    %v95 = vsel %vm93, %v86, 0
    %97 = vmatpush.bf16.msra.mxu0 0
    %98 = vmatpush.bf16.msra.mxu0 0
    %99 = vmatpush.bf16.msra.mxu0 0
    %100 = vmatpush.bf16.msra.mxu0 0
    %101 = vmatpush.bf16.msra.mxu0 0
    %102 = vmatpush.bf16.msra.mxu0 0
    %103 = vmatpush.bf16.msra.mxu0 0
    %104 = vmatpush.bf16.msra.mxu0 %v91
    %105 = vmatmul.bf16.gmra.mxu0 %v95
    %v106 = vpop.f32.mrf.mxu0
    %v107 = vadd.f32 0.0, %v106
    %v108 = vpop.f32.mrf.mxu0
    %v109 = vadd.f32 0.0, %v108
    %110 = vdwg.mxu0
    %v111 = vpack.c.bf16 %v107, %v107
    %v112 = vpack.c.bf16 %v109, %v109
    %v113 = vld [vmem:[%s1] sm:$0xf]
    %v114 = vld [vmem:[%s1 + $0x4] sm:$0xf]
    %v115 = vld [vmem:[#allocation5] sm:$0xf]
    %v116 = vld [vmem:[#allocation5 + $0x4] sm:$0xf]
    %v119 = vunpack.c.l.b16 %v113
    %v120 = vunpack.c.l.b16 %v114
    %v121 = vpack.c.b16 %v120, %v119
    %v124 = vunpack.c.l.b16 %v115
    %v125 = vunpack.c.l.b16 %v116
    %v126 = vpack.c.b16 %v125, %v124
    %v129 = vsel %vm93, %v121, 0
    %131 = vmatpush.bf16.msra.mxu0 0
    %132 = vmatpush.bf16.msra.mxu0 0
    %133 = vmatpush.bf16.msra.mxu0 0
    %134 = vmatpush.bf16.msra.mxu0 0
    %135 = vmatpush.bf16.msra.mxu0 0
    %136 = vmatpush.bf16.msra.mxu0 0
    %137 = vmatpush.bf16.msra.mxu0 0
    %138 = vmatpush.bf16.msra.mxu0 %v126
    %139 = vmatmul.bf16.gmra.mxu0 %v129
    %v140 = vpop.f32.mrf.mxu0
    %v141 = vadd.f32 0.0, %v140
    %v142 = vpop.f32.mrf.mxu0
    %v143 = vadd.f32 0.0, %v142
    %144 = vdwg.mxu0
    %v145 = vpack.c.bf16 %v141, %v141
    %v146 = vpack.c.bf16 %v143, %v143
    %v147 = vld [vmem:[%s2] sm:$0xf]
    %v148 = vld [vmem:[%s2 + $0x4] sm:$0xf]
    %v149 = vld [vmem:[#allocation7] sm:$0xf]
    %v150 = vld [vmem:[#allocation7 + $0x4] sm:$0xf]
    %v153 = vunpack.c.l.b16 %v147
    %v154 = vunpack.c.l.b16 %v148
    %v155 = vpack.c.b16 %v154, %v153
    %v158 = vunpack.c.l.b16 %v149
    %v159 = vunpack.c.l.b16 %v150
    %v160 = vpack.c.b16 %v159, %v158
    %v163 = vsel %vm93, %v155, 0
    %165 = vmatpush.bf16.msra.mxu0 0
    %166 = vmatpush.bf16.msra.mxu0 0
    %167 = vmatpush.bf16.msra.mxu0 0
    %168 = vmatpush.bf16.msra.mxu0 0
    %169 = vmatpush.bf16.msra.mxu0 0
    %170 = vmatpush.bf16.msra.mxu0 0
    %171 = vmatpush.bf16.msra.mxu0 0
    %172 = vmatpush.bf16.msra.mxu0 %v160
    %173 = vmatmul.bf16.gmra.mxu0 %v163
    %v174 = vpop.f32.mrf.mxu0
    %v175 = vadd.f32 0.0, %v174
    %v176 = vpop.f32.mrf.mxu0
    %v177 = vadd.f32 0.0, %v176
    %178 = vdwg.mxu0
    %v179 = vpack.c.bf16 %v175, %v175
    %v180 = vpack.c.bf16 %v177, %v177
    %v181 = vld [vmem:[%s6] sm:$0xf]
    %v182 = vld [vmem:[%s6 + $0x4] sm:$0xf]
    %v183 = vld [vmem:[%s6 + $0x8] sm:$0xf]
    %v184 = vld [vmem:[%s6 + $0xc] sm:$0xf]
    %v185 = vld [vmem:[%s7] sm:$0x1]
    %vm186 = vcmask 64512
    %v188 = vsel %vm186, %v111, 0
    %v191 = vsel %vm186, %v145, 0
    %193 = vmatpush.bf16.xpose.msra.mxu0 0
    %194 = vmatpush.bf16.xpose.msra.mxu0 0
    %195 = vmatpush.bf16.xpose.msra.mxu0 0
    %196 = vmatpush.bf16.xpose.msra.mxu0 0
    %197 = vmatpush.bf16.xpose.msra.mxu0 0
    %198 = vmatpush.bf16.xpose.msra.mxu0 0
    %199 = vmatpush.bf16.xpose.msra.mxu0 0
    %200 = vmatpush.bf16.xpose.msra.mxu0 %v191
    %201 = vmatmul.bf16.gmra.mxu0 %v188
    %v202 = vpop.f32.mrf.mxu0
    %v203 = vadd.f32 0.0, %v202
    %v204 = vpop.f32.mrf.mxu0
    %205 = vdwg.mxu0
    %v206 = vsel %vm186, %v203, -inf
    %207 = vmax.xlane.f32.xlu0 %v206
    %v208 = vpop.xlane.xlu0 %207
    %v209 = vsub.f32 %v203, %v208
    %v210 = vmul.f32 %v209, 1.442695
    %v211 = vpow.pop %v210
    %v212 = vsel %vm186, %v211, 0.0
    %213 = vadd.xlane.f32.xlu0 %v212
    %v214 = vpop.xlane.xlu0 %213
    %v215 = vrcp.pop %v214
    %v216 = vmul.f32 %v211, %v215
    %v217 = vpack.c.bf16 %v216, %v216
    %v219 = vsel %vm186, %v217, 0
    %vm221 = vcmask 1043456
    %v223 = vsel %vm221, %v179, 0
    %225 = vmatpush.bf16.msra.mxu0 0
    %226 = vmatpush.bf16.msra.mxu0 0
    %227 = vmatpush.bf16.msra.mxu0 0
    %228 = vmatpush.bf16.msra.mxu0 0
    %229 = vmatpush.bf16.msra.mxu0 0
    %230 = vmatpush.bf16.msra.mxu0 0
    %231 = vmatpush.bf16.msra.mxu0 0
    %232 = vmatpush.bf16.msra.mxu0 %v223
    %233 = vmatmul.bf16.gmra.mxu0 %v219
    %v234 = vpop.f32.mrf.mxu0
    %v235 = vadd.f32 0.0, %v234
    %v236 = vpop.f32.mrf.mxu0
    %237 = vdwg.mxu0
    %v238 = vpack.c.bf16 %v235, %v235
    %v240 = vunpack.c.l.b16 %v111
    %v241 = vpack.c.b16 %v240, %v240
    %242 = vrot.lane.b32.xlu0 %v241, 120
    %v243 = vpop.permute.xlu0 %242
    %v245 = vunpack.c.l.b16 %v145
    %v246 = vpack.c.b16 %v245, %v245
    %247 = vrot.lane.b32.xlu0 %v246, 120
    %v248 = vpop.permute.xlu0 %247
    %v250 = vsel %vm186, %v243, 0
    %v253 = vsel %vm186, %v248, 0
    %255 = vmatpush.bf16.xpose.msra.mxu0 0
    %256 = vmatpush.bf16.xpose.msra.mxu0 0
    %257 = vmatpush.bf16.xpose.msra.mxu0 0
    %258 = vmatpush.bf16.xpose.msra.mxu0 0
    %259 = vmatpush.bf16.xpose.msra.mxu0 0
    %260 = vmatpush.bf16.xpose.msra.mxu0 0
    %261 = vmatpush.bf16.xpose.msra.mxu0 0
    %262 = vmatpush.bf16.xpose.msra.mxu0 %v253
    %263 = vmatmul.bf16.gmra.mxu0 %v250
    %v264 = vpop.f32.mrf.mxu0
    %v265 = vadd.f32 0.0, %v264
    %v266 = vpop.f32.mrf.mxu0
    %267 = vdwg.mxu0
    %v268 = vsel %vm186, %v265, -inf
    %269 = vmax.xlane.f32.xlu0 %v268
    %v270 = vpop.xlane.xlu0 %269
    %v271 = vsub.f32 %v265, %v270
    %v272 = vmul.f32 %v271, 1.442695
    %v273 = vpow.pop %v272
    %v274 = vsel %vm186, %v273, 0.0
    %275 = vadd.xlane.f32.xlu0 %v274
    %v276 = vpop.xlane.xlu0 %275
    %v277 = vrcp.pop %v276
    %v278 = vmul.f32 %v273, %v277
    %v279 = vpack.c.bf16 %v278, %v278
    %v281 = vunpack.c.l.b16 %v179
    %v282 = vpack.c.b16 %v281, %v281
    %283 = vrot.lane.b32.xlu0 %v282, 120
    %v284 = vpop.permute.xlu0 %283
    %v286 = vsel %vm186, %v279, 0
    %v289 = vsel %vm221, %v284, 0
    %291 = vmatpush.bf16.msra.mxu0 0
    %292 = vmatpush.bf16.msra.mxu0 0
    %293 = vmatpush.bf16.msra.mxu0 0
    %294 = vmatpush.bf16.msra.mxu0 0
    %295 = vmatpush.bf16.msra.mxu0 0
    %296 = vmatpush.bf16.msra.mxu0 0
    %297 = vmatpush.bf16.msra.mxu0 0
    %298 = vmatpush.bf16.msra.mxu0 %v289
    %299 = vmatmul.bf16.gmra.mxu0 %v286
    %v300 = vpop.f32.mrf.mxu0
    %v301 = vadd.f32 0.0, %v300
    %v302 = vpop.f32.mrf.mxu0
    %303 = vdwg.mxu0
    %v304 = vpack.c.bf16 %v301, %v301
    %v306 = vsel %vm186, %v304, 0
    %v309 = vsel %vm221, %v182, 0
    %311 = vmatpush.bf16.msra.mxu0 0
    %312 = vmatpush.bf16.msra.mxu0 0
    %313 = vmatpush.bf16.msra.mxu0 0
    %314 = vmatpush.bf16.msra.mxu0 0
    %315 = vmatpush.bf16.msra.mxu0 0
    %316 = vmatpush.bf16.msra.mxu0 0
    %317 = vmatpush.bf16.msra.mxu0 0
    %318 = vmatpush.bf16.msra.mxu0 %v309
    %319 = vmatmul.bf16.gmra.mxu0 %v306
    %v320 = vpop.f32.mrf.mxu0
    %v321 = vadd.f32 0.0, %v320
    %v322 = vpop.f32.mrf.mxu0
    %323 = vdwg.mxu0
    %v325 = vsel %vm186, %v238, 0
    %v328 = vsel %vm221, %v181, 0
    %330 = vmatpush.bf16.msra.mxu0 0
    %331 = vmatpush.bf16.msra.mxu0 0
    %332 = vmatpush.bf16.msra.mxu0 0
    %333 = vmatpush.bf16.msra.mxu0 0
    %334 = vmatpush.bf16.msra.mxu0 0
    %335 = vmatpush.bf16.msra.mxu0 0
    %336 = vmatpush.bf16.msra.mxu0 0
    %337 = vmatpush.bf16.msra.mxu0 %v328
    %338 = vmatmul.bf16.gmra.mxu0 %v325
    %v339 = vpop.f32.mrf.mxu0
    %v340 = vadd.f32 %v321, %v339
    %v341 = vpop.f32.mrf.mxu0
    %342 = vdwg.mxu0
    %343 = vrot.lane.b32.xlu0 %v241, 112
    %v344 = vpop.permute.xlu0 %343
    %345 = vrot.lane.b32.xlu0 %v246, 112
    %v346 = vpop.permute.xlu0 %345
    %v348 = vsel %vm186, %v344, 0
    %v351 = vsel %vm186, %v346, 0
    %353 = vmatpush.bf16.xpose.msra.mxu0 0
    %354 = vmatpush.bf16.xpose.msra.mxu0 0
    %355 = vmatpush.bf16.xpose.msra.mxu0 0
    %356 = vmatpush.bf16.xpose.msra.mxu0 0
    %357 = vmatpush.bf16.xpose.msra.mxu0 0
    %358 = vmatpush.bf16.xpose.msra.mxu0 0
    %359 = vmatpush.bf16.xpose.msra.mxu0 0
    %360 = vmatpush.bf16.xpose.msra.mxu0 %v351
    %361 = vmatmul.bf16.gmra.mxu0 %v348
    %v362 = vpop.f32.mrf.mxu0
    %v363 = vadd.f32 0.0, %v362
    %v364 = vpop.f32.mrf.mxu0
    %365 = vdwg.mxu0
    %v366 = vsel %vm186, %v363, -inf
    %367 = vmax.xlane.f32.xlu0 %v366
    %v368 = vpop.xlane.xlu0 %367
    %v369 = vsub.f32 %v363, %v368
    %v370 = vmul.f32 %v369, 1.442695
    %v371 = vpow.pop %v370
    %v372 = vsel %vm186, %v371, 0.0
    %373 = vadd.xlane.f32.xlu0 %v372
    %v374 = vpop.xlane.xlu0 %373
    %v375 = vrcp.pop %v374
    %v376 = vmul.f32 %v371, %v375
    %v377 = vpack.c.bf16 %v376, %v376
    %378 = vrot.lane.b32.xlu0 %v282, 112
    %v379 = vpop.permute.xlu0 %378
    %v381 = vsel %vm186, %v377, 0
    %v384 = vsel %vm221, %v379, 0
    %386 = vmatpush.bf16.msra.mxu0 0
    %387 = vmatpush.bf16.msra.mxu0 0
    %388 = vmatpush.bf16.msra.mxu0 0
    %389 = vmatpush.bf16.msra.mxu0 0
    %390 = vmatpush.bf16.msra.mxu0 0
    %391 = vmatpush.bf16.msra.mxu0 0
    %392 = vmatpush.bf16.msra.mxu0 0
    %393 = vmatpush.bf16.msra.mxu0 %v384
    %394 = vmatmul.bf16.gmra.mxu0 %v381
    %v395 = vpop.f32.mrf.mxu0
    %v396 = vadd.f32 0.0, %v395
    %v397 = vpop.f32.mrf.mxu0
    %398 = vdwg.mxu0
    %v399 = vpack.c.bf16 %v396, %v396
    %v401 = vsel %vm186, %v399, 0
    %v404 = vsel %vm221, %v183, 0
    %406 = vmatpush.bf16.msra.mxu0 0
    %407 = vmatpush.bf16.msra.mxu0 0
    %408 = vmatpush.bf16.msra.mxu0 0
    %409 = vmatpush.bf16.msra.mxu0 0
    %410 = vmatpush.bf16.msra.mxu0 0
    %411 = vmatpush.bf16.msra.mxu0 0
    %412 = vmatpush.bf16.msra.mxu0 0
    %413 = vmatpush.bf16.msra.mxu0 %v404
    %414 = vmatmul.bf16.gmra.mxu0 %v401
    %v415 = vpop.f32.mrf.mxu0
    %v416 = vadd.f32 0.0, %v415
    %v417 = vpop.f32.mrf.mxu0
    %418 = vdwg.mxu0
    %v419 = vadd.f32 %v340, %v416
    %420 = vrot.lane.b32.xlu0 %v241, 104
    %v421 = vpop.permute.xlu0 %420
    %422 = vrot.lane.b32.xlu0 %v246, 104
    %v423 = vpop.permute.xlu0 %422
    %v425 = vsel %vm186, %v421, 0
    %v428 = vsel %vm186, %v423, 0
    %430 = vmatpush.bf16.xpose.msra.mxu0 0
    %431 = vmatpush.bf16.xpose.msra.mxu0 0
    %432 = vmatpush.bf16.xpose.msra.mxu0 0
    %433 = vmatpush.bf16.xpose.msra.mxu0 0
    %434 = vmatpush.bf16.xpose.msra.mxu0 0
    %435 = vmatpush.bf16.xpose.msra.mxu0 0
    %436 = vmatpush.bf16.xpose.msra.mxu0 0
    %437 = vmatpush.bf16.xpose.msra.mxu0 %v428
    %438 = vmatmul.bf16.gmra.mxu0 %v425
    %v439 = vpop.f32.mrf.mxu0
    %v440 = vadd.f32 0.0, %v439
    %v441 = vpop.f32.mrf.mxu0
    %442 = vdwg.mxu0
    %v443 = vsel %vm186, %v440, -inf
    %444 = vmax.xlane.f32.xlu0 %v443
    %v445 = vpop.xlane.xlu0 %444
    %v446 = vsub.f32 %v440, %v445
    %v447 = vmul.f32 %v446, 1.442695
    %v448 = vpow.pop %v447
    %v449 = vsel %vm186, %v448, 0.0
    %450 = vadd.xlane.f32.xlu0 %v449
    %v451 = vpop.xlane.xlu0 %450
    %v452 = vrcp.pop %v451
    %v453 = vmul.f32 %v448, %v452
    %v454 = vpack.c.bf16 %v453, %v453
    %455 = vrot.lane.b32.xlu0 %v282, 104
    %v456 = vpop.permute.xlu0 %455
    %v458 = vsel %vm186, %v454, 0
    %v461 = vsel %vm221, %v456, 0
    %463 = vmatpush.bf16.msra.mxu0 0
    %464 = vmatpush.bf16.msra.mxu0 0
    %465 = vmatpush.bf16.msra.mxu0 0
    %466 = vmatpush.bf16.msra.mxu0 0
    %467 = vmatpush.bf16.msra.mxu0 0
    %468 = vmatpush.bf16.msra.mxu0 0
    %469 = vmatpush.bf16.msra.mxu0 0
    %470 = vmatpush.bf16.msra.mxu0 %v461
    %471 = vmatmul.bf16.gmra.mxu0 %v458
    %v472 = vpop.f32.mrf.mxu0
    %v473 = vadd.f32 0.0, %v472
    %v474 = vpop.f32.mrf.mxu0
    %475 = vdwg.mxu0
    %v476 = vpack.c.bf16 %v473, %v473
    %v478 = vsel %vm186, %v476, 0
    %v481 = vsel %vm221, %v184, 0
    %483 = vmatpush.bf16.msra.mxu0 0
    %484 = vmatpush.bf16.msra.mxu0 0
    %485 = vmatpush.bf16.msra.mxu0 0
    %486 = vmatpush.bf16.msra.mxu0 0
    %487 = vmatpush.bf16.msra.mxu0 0
    %488 = vmatpush.bf16.msra.mxu0 0
    %489 = vmatpush.bf16.msra.mxu0 0
    %490 = vmatpush.bf16.msra.mxu0 %v481
    %491 = vmatmul.bf16.gmra.mxu0 %v478
    %v492 = vpop.f32.mrf.mxu0
    %v493 = vadd.f32 0.0, %v492
    %v494 = vpop.f32.mrf.mxu0
    %495 = vdwg.mxu0
    %v496 = vadd.f32 %v419, %v493
    %v498 = vperm.slane %v185, 0
    %v500 = vadd.f32 %v496, %v498
    %501 = vst.msk [vmem:[#allocation8] sm:$0xff] %vm93, %v500
    %v503 = vsel %vm186, %v112, 0
    %v506 = vsel %vm186, %v146, 0
    %508 = vmatpush.bf16.xpose.msra.mxu0 0
    %509 = vmatpush.bf16.xpose.msra.mxu0 0
    %510 = vmatpush.bf16.xpose.msra.mxu0 0
    %511 = vmatpush.bf16.xpose.msra.mxu0 0
    %512 = vmatpush.bf16.xpose.msra.mxu0 0
    %513 = vmatpush.bf16.xpose.msra.mxu0 0
    %514 = vmatpush.bf16.xpose.msra.mxu0 0
    %515 = vmatpush.bf16.xpose.msra.mxu0 %v506
    %516 = vmatmul.bf16.gmra.mxu0 %v503
    %v517 = vpop.f32.mrf.mxu0
    %v518 = vadd.f32 0.0, %v517
    %v519 = vpop.f32.mrf.mxu0
    %520 = vdwg.mxu0
    %v521 = vsel %vm186, %v518, -inf
    %522 = vmax.xlane.f32.xlu0 %v521
    %v523 = vpop.xlane.xlu0 %522
    %v524 = vsub.f32 %v518, %v523
    %v525 = vmul.f32 %v524, 1.442695
    %v526 = vpow.pop %v525
    %v527 = vsel %vm186, %v526, 0.0
    %528 = vadd.xlane.f32.xlu0 %v527
    %v529 = vpop.xlane.xlu0 %528
    %v530 = vrcp.pop %v529
    %v531 = vmul.f32 %v526, %v530
    %v532 = vpack.c.bf16 %v531, %v531
    %v534 = vsel %vm186, %v532, 0
    %v537 = vsel %vm221, %v180, 0
    %539 = vmatpush.bf16.msra.mxu0 0
    %540 = vmatpush.bf16.msra.mxu0 0
    %541 = vmatpush.bf16.msra.mxu0 0
    %542 = vmatpush.bf16.msra.mxu0 0
    %543 = vmatpush.bf16.msra.mxu0 0
    %544 = vmatpush.bf16.msra.mxu0 0
    %545 = vmatpush.bf16.msra.mxu0 0
    %546 = vmatpush.bf16.msra.mxu0 %v537
    %547 = vmatmul.bf16.gmra.mxu0 %v534
    %v548 = vpop.f32.mrf.mxu0
    %v549 = vadd.f32 0.0, %v548
    %v550 = vpop.f32.mrf.mxu0
    %551 = vdwg.mxu0
    %v552 = vpack.c.bf16 %v549, %v549
    %v554 = vunpack.c.l.b16 %v112
    %v555 = vpack.c.b16 %v554, %v554
    %556 = vrot.lane.b32.xlu0 %v555, 120
    %v557 = vpop.permute.xlu0 %556
    %v559 = vunpack.c.l.b16 %v146
    %v560 = vpack.c.b16 %v559, %v559
    %561 = vrot.lane.b32.xlu0 %v560, 120
    %v562 = vpop.permute.xlu0 %561
    %v564 = vsel %vm186, %v557, 0
    %v567 = vsel %vm186, %v562, 0
    %569 = vmatpush.bf16.xpose.msra.mxu0 0
    %570 = vmatpush.bf16.xpose.msra.mxu0 0
    %571 = vmatpush.bf16.xpose.msra.mxu0 0
    %572 = vmatpush.bf16.xpose.msra.mxu0 0
    %573 = vmatpush.bf16.xpose.msra.mxu0 0
    %574 = vmatpush.bf16.xpose.msra.mxu0 0
    %575 = vmatpush.bf16.xpose.msra.mxu0 0
    %576 = vmatpush.bf16.xpose.msra.mxu0 %v567
    %577 = vmatmul.bf16.gmra.mxu0 %v564
    %v578 = vpop.f32.mrf.mxu0
    %v579 = vadd.f32 0.0, %v578
    %v580 = vpop.f32.mrf.mxu0
    %581 = vdwg.mxu0
    %v582 = vsel %vm186, %v579, -inf
    %583 = vmax.xlane.f32.xlu0 %v582
    %v584 = vpop.xlane.xlu0 %583
    %v585 = vsub.f32 %v579, %v584
    %v586 = vmul.f32 %v585, 1.442695
    %v587 = vpow.pop %v586
    %v588 = vsel %vm186, %v587, 0.0
    %589 = vadd.xlane.f32.xlu0 %v588
    %v590 = vpop.xlane.xlu0 %589
    %v591 = vrcp.pop %v590
    %v592 = vmul.f32 %v587, %v591
    %v593 = vpack.c.bf16 %v592, %v592
    %v595 = vunpack.c.l.b16 %v180
    %v596 = vpack.c.b16 %v595, %v595
    %597 = vrot.lane.b32.xlu0 %v596, 120
    %v598 = vpop.permute.xlu0 %597
    %v600 = vsel %vm186, %v593, 0
    %v603 = vsel %vm221, %v598, 0
    %605 = vmatpush.bf16.msra.mxu0 0
    %606 = vmatpush.bf16.msra.mxu0 0
    %607 = vmatpush.bf16.msra.mxu0 0
    %608 = vmatpush.bf16.msra.mxu0 0
    %609 = vmatpush.bf16.msra.mxu0 0
    %610 = vmatpush.bf16.msra.mxu0 0
    %611 = vmatpush.bf16.msra.mxu0 0
    %612 = vmatpush.bf16.msra.mxu0 %v603
    %613 = vmatmul.bf16.gmra.mxu0 %v600
    %v614 = vpop.f32.mrf.mxu0
    %v615 = vadd.f32 0.0, %v614
    %v616 = vpop.f32.mrf.mxu0
    %617 = vdwg.mxu0
    %v618 = vpack.c.bf16 %v615, %v615
    %v620 = vsel %vm186, %v618, 0
    %622 = vmatpush.bf16.msra.mxu0 0
    %623 = vmatpush.bf16.msra.mxu0 0
    %624 = vmatpush.bf16.msra.mxu0 0
    %625 = vmatpush.bf16.msra.mxu0 0
    %626 = vmatpush.bf16.msra.mxu0 0
    %627 = vmatpush.bf16.msra.mxu0 0
    %628 = vmatpush.bf16.msra.mxu0 0
    %629 = vmatpush.bf16.msra.mxu0 %v309
    %630 = vmatmul.bf16.gmra.mxu0 %v620
    %v631 = vpop.f32.mrf.mxu0
    %v632 = vadd.f32 0.0, %v631
    %v633 = vpop.f32.mrf.mxu0
    %634 = vdwg.mxu0
    %v636 = vsel %vm186, %v552, 0
    %638 = vmatpush.bf16.msra.mxu0 0
    %639 = vmatpush.bf16.msra.mxu0 0
    %640 = vmatpush.bf16.msra.mxu0 0
    %641 = vmatpush.bf16.msra.mxu0 0
    %642 = vmatpush.bf16.msra.mxu0 0
    %643 = vmatpush.bf16.msra.mxu0 0
    %644 = vmatpush.bf16.msra.mxu0 0
    %645 = vmatpush.bf16.msra.mxu0 %v328
    %646 = vmatmul.bf16.gmra.mxu0 %v636
    %v647 = vpop.f32.mrf.mxu0
    %v648 = vadd.f32 %v632, %v647
    %v649 = vpop.f32.mrf.mxu0
    %650 = vdwg.mxu0
    %651 = vrot.lane.b32.xlu0 %v555, 112
    %v652 = vpop.permute.xlu0 %651
    %653 = vrot.lane.b32.xlu0 %v560, 112
    %v654 = vpop.permute.xlu0 %653
    %v656 = vsel %vm186, %v652, 0
    %v659 = vsel %vm186, %v654, 0
    %661 = vmatpush.bf16.xpose.msra.mxu0 0
    %662 = vmatpush.bf16.xpose.msra.mxu0 0
    %663 = vmatpush.bf16.xpose.msra.mxu0 0
    %664 = vmatpush.bf16.xpose.msra.mxu0 0
    %665 = vmatpush.bf16.xpose.msra.mxu0 0
    %666 = vmatpush.bf16.xpose.msra.mxu0 0
    %667 = vmatpush.bf16.xpose.msra.mxu0 0
    %668 = vmatpush.bf16.xpose.msra.mxu0 %v659
    %669 = vmatmul.bf16.gmra.mxu0 %v656
    %v670 = vpop.f32.mrf.mxu0
    %v671 = vadd.f32 0.0, %v670
    %v672 = vpop.f32.mrf.mxu0
    %673 = vdwg.mxu0
    %v674 = vsel %vm186, %v671, -inf
    %675 = vmax.xlane.f32.xlu0 %v674
    %v676 = vpop.xlane.xlu0 %675
    %v677 = vsub.f32 %v671, %v676
    %v678 = vmul.f32 %v677, 1.442695
    %v679 = vpow.pop %v678
    %v680 = vsel %vm186, %v679, 0.0
    %681 = vadd.xlane.f32.xlu0 %v680
    %v682 = vpop.xlane.xlu0 %681
    %v683 = vrcp.pop %v682
    %v684 = vmul.f32 %v679, %v683
    %v685 = vpack.c.bf16 %v684, %v684
    %686 = vrot.lane.b32.xlu0 %v596, 112
    %v687 = vpop.permute.xlu0 %686
    %v689 = vsel %vm186, %v685, 0
    %v692 = vsel %vm221, %v687, 0
    %694 = vmatpush.bf16.msra.mxu0 0
    %695 = vmatpush.bf16.msra.mxu0 0
    %696 = vmatpush.bf16.msra.mxu0 0
    %697 = vmatpush.bf16.msra.mxu0 0
    %698 = vmatpush.bf16.msra.mxu0 0
    %699 = vmatpush.bf16.msra.mxu0 0
    %700 = vmatpush.bf16.msra.mxu0 0
    %701 = vmatpush.bf16.msra.mxu0 %v692
    %702 = vmatmul.bf16.gmra.mxu0 %v689
    %v703 = vpop.f32.mrf.mxu0
    %v704 = vadd.f32 0.0, %v703
    %v705 = vpop.f32.mrf.mxu0
    %706 = vdwg.mxu0
    %v707 = vpack.c.bf16 %v704, %v704
    %v709 = vsel %vm186, %v707, 0
    %711 = vmatpush.bf16.msra.mxu0 0
    %712 = vmatpush.bf16.msra.mxu0 0
    %713 = vmatpush.bf16.msra.mxu0 0
    %714 = vmatpush.bf16.msra.mxu0 0
    %715 = vmatpush.bf16.msra.mxu0 0
    %716 = vmatpush.bf16.msra.mxu0 0
    %717 = vmatpush.bf16.msra.mxu0 0
    %718 = vmatpush.bf16.msra.mxu0 %v404
    %719 = vmatmul.bf16.gmra.mxu0 %v709
    %v720 = vpop.f32.mrf.mxu0
    %v721 = vadd.f32 0.0, %v720
    %v722 = vpop.f32.mrf.mxu0
    %723 = vdwg.mxu0
    %v724 = vadd.f32 %v648, %v721
    %725 = vrot.lane.b32.xlu0 %v555, 104
    %v726 = vpop.permute.xlu0 %725
    %727 = vrot.lane.b32.xlu0 %v560, 104
    %v728 = vpop.permute.xlu0 %727
    %v730 = vsel %vm186, %v726, 0
    %v733 = vsel %vm186, %v728, 0
    %735 = vmatpush.bf16.xpose.msra.mxu0 0
    %736 = vmatpush.bf16.xpose.msra.mxu0 0
    %737 = vmatpush.bf16.xpose.msra.mxu0 0
    %738 = vmatpush.bf16.xpose.msra.mxu0 0
    %739 = vmatpush.bf16.xpose.msra.mxu0 0
    %740 = vmatpush.bf16.xpose.msra.mxu0 0
    %741 = vmatpush.bf16.xpose.msra.mxu0 0
    %742 = vmatpush.bf16.xpose.msra.mxu0 %v733
    %743 = vmatmul.bf16.gmra.mxu0 %v730
    %v744 = vpop.f32.mrf.mxu0
    %v745 = vadd.f32 0.0, %v744
    %v746 = vpop.f32.mrf.mxu0
    %747 = vdwg.mxu0
    %v748 = vsel %vm186, %v745, -inf
    %749 = vmax.xlane.f32.xlu0 %v748
    %v750 = vpop.xlane.xlu0 %749
    %v751 = vsub.f32 %v745, %v750
    %v752 = vmul.f32 %v751, 1.442695
    %v753 = vpow.pop %v752
    %v754 = vsel %vm186, %v753, 0.0
    %755 = vadd.xlane.f32.xlu0 %v754
    %v756 = vpop.xlane.xlu0 %755
    %v757 = vrcp.pop %v756
    %v758 = vmul.f32 %v753, %v757
    %v759 = vpack.c.bf16 %v758, %v758
    %760 = vrot.lane.b32.xlu0 %v596, 104
    %v761 = vpop.permute.xlu0 %760
    %v763 = vsel %vm186, %v759, 0
    %v766 = vsel %vm221, %v761, 0
    %768 = vmatpush.bf16.msra.mxu0 0
    %769 = vmatpush.bf16.msra.mxu0 0
    %770 = vmatpush.bf16.msra.mxu0 0
    %771 = vmatpush.bf16.msra.mxu0 0
    %772 = vmatpush.bf16.msra.mxu0 0
    %773 = vmatpush.bf16.msra.mxu0 0
    %774 = vmatpush.bf16.msra.mxu0 0
    %775 = vmatpush.bf16.msra.mxu0 %v766
    %776 = vmatmul.bf16.gmra.mxu0 %v763
    %v777 = vpop.f32.mrf.mxu0
    %v778 = vadd.f32 0.0, %v777
    %v779 = vpop.f32.mrf.mxu0
    %780 = vdwg.mxu0
    %v781 = vpack.c.bf16 %v778, %v778
    %v783 = vsel %vm186, %v781, 0
    %785 = vmatpush.bf16.msra.mxu0 0
    %786 = vmatpush.bf16.msra.mxu0 0
    %787 = vmatpush.bf16.msra.mxu0 0
    %788 = vmatpush.bf16.msra.mxu0 0
    %789 = vmatpush.bf16.msra.mxu0 0
    %790 = vmatpush.bf16.msra.mxu0 0
    %791 = vmatpush.bf16.msra.mxu0 0
    %792 = vmatpush.bf16.msra.mxu0 %v481
    %793 = vmatmul.bf16.gmra.mxu0 %v783
    %v794 = vpop.f32.mrf.mxu0
    %v795 = vadd.f32 0.0, %v794
    %v796 = vpop.f32.mrf.mxu0
    %797 = vdwg.mxu0
    %v798 = vadd.f32 %v724, %v795
    %v799 = vadd.f32 %v798, %v498
    %800 = vst.msk [vmem:[#allocation8 + $0x8] sm:$0xff] %vm93, %v799
    // Predicated region
    $region46: #{tpu_custom_call.1} parent=1 // pred_check
      _
    $region47: #{tpu_custom_call.1} parent=1 // pred_check_branch
      %802 = sbr.rel (0) target = $region49
    $region48: #{tpu_custom_call.1} parent=1 // pred_region
      %804 = vsyncadd [#allocation4], 0
      %s805 = sshll.u32 [#allocation8], 4
      %s806 = int_to_ptr.vmem [resolvable:$true] %s805
      %s807 = sshll.u32 %s8, 4
      %s808 = int_to_ptr.hbm [resolvable:$true] %s807
      %813 = dma.vmem_to_hbm [thread:$0]  %s806, 256, %s808, [#allocation4], 128, 128, 8
    $region49: #{tpu_custom_call.1} parent=1 // pred_fallthru
      _
    // Predicated region
    $region50: #{tpu_custom_call.1} parent=1 // pred_check
      _
    $region51: #{tpu_custom_call.1} parent=1 // pred_check_branch
      %815 = sbr.rel (0) target = $region53
    $region52: #{tpu_custom_call.1} parent=1 // pred_region
      %817 = dma.done [#allocation4], 256
    $region53: #{tpu_custom_call.1} parent=1 // pred_fallthru
      _
    %818 = vsyncpa [#allocation3], 1
    %819 = vsyncpa [#allocation6], 1
    %820 = vsyncpa [#allocation4], 1

</llo_original>
